<compile_context>
chip_gen: v7x
topology: tpu7x:2x2x1
jax: 0.10.0
libtpu: 0.0.40
codegen_flags: <defaults>
</compile_context>

<pallas_src>
import jax
import jax.numpy as jnp
from jax.experimental import pallas as pl
from jax.experimental.pallas import tpu as pltpu


def _make_loss_kernel(th, wp, h, w, w_sl1, w_gx, w_gy):
    """Kernel closed over static sizes and folded weights.

    Block shapes seen by the kernel:
      pred_ref / true_ref   : (1, th, wp)   one H-tile of one (batch*chan) plane
      pred_hal / true_hal   : (1, 8,  wp)   first rows of the NEXT H-tile (halo)
      out_ref               : (1, 1, 8, wp) weighted per-lane partial sums
    """
    nblk = th // 8

    def kernel(pred_ref, true_ref, pred_hal, true_hal, out_ref):
        t_idx = pl.program_id(1)

        p = pred_ref[0].astype(jnp.float32)          # (th, wp)
        g = true_ref[0].astype(jnp.float32)

        # ---- smooth L1 (padded rows/cols are 0 in both -> contribute 0) ----
        d = jnp.abs(p - g)
        sl1 = jnp.where(d < 1.0, 0.5 * d * d, d - 0.5)

        # ---- x-gradient: pair column j with j+1 via a full-width lane roll.
        # roll(x, wp-1, 1)[:, j] == x[:, (j+1) % wp]  (jnp.roll convention).
        px = pltpu.roll(p, wp - 1, 1)
        gx_t = pltpu.roll(g, wp - 1, 1)
        gx = jnp.abs(jnp.abs(p - px) - jnp.abs(g - gx_t))
        # (1, wp) lane mask * weight: drops pad columns AND the wrap column.
        col = jax.lax.broadcasted_iota(jnp.int32, (1, wp), 1)
        xw = jnp.where(col < (w - 1), jnp.float32(w_gx), jnp.float32(0.0))

        # ---- y-gradient within the tile: pair row r with r+1 via sublane roll.
        py = pltpu.roll(p, th - 1, 0)
        gy_t = pltpu.roll(g, th - 1, 0)
        gy = jnp.abs(jnp.abs(p - py) - jnp.abs(g - gy_t))
        # (th, 1) sublane mask * weight: keep rows whose global index < H-1 and
        # drop the wrapped last local row (its true pair is the seam below).
        r_loc = jax.lax.broadcasted_iota(jnp.int32, (th, 1), 0)
        r_glob = r_loc + t_idx * th
        yw = jnp.where((r_glob < (h - 1)) & (r_loc < (th - 1)),
                       jnp.float32(w_gy), jnp.float32(0.0))

        # ---- weighted combine + sublane-group reduction to a dense (8, wp) ---
        combined = jnp.float32(w_sl1) * sl1 + gx * xw + gy * yw   # (th, wp)
        partial8 = combined[0:8, :]
        for kb in range(1, nblk):                                  # VALU adds only
            partial8 = partial8 + combined[kb * 8:(kb + 1) * 8, :]
        out_ref[0, 0, :, :] = partial8

        # ---- seam: last row of this tile paired with first row of next tile.
        p_last = p[th - 1:th, :]
        g_last = g[th - 1:th, :]
        p_next = pred_hal[0, 0:1, :].astype(jnp.float32)
        g_next = true_hal[0, 0:1, :].astype(jnp.float32)
        seam = jnp.abs(jnp.abs(p_last - p_next) - jnp.abs(g_last - g_next))
        seam_w = jnp.where((t_idx + 1) * th < h,
                           jnp.float32(w_gy), jnp.float32(0.0))
        out_ref[0, 0, 0:1, :] = out_ref[0, 0, 0:1, :] + seam * seam_w

    return kernel


def _pick_vmem_limit():
    """Generation-aware scoped-VMEM limit with a conservative fallback."""
    try:
        cap = pltpu.get_tpu_info().vmem_capacity_bytes
    except Exception:  # older jax / query unavailable
        cap = None
    if cap is not None and cap >= 96 * 1024 * 1024:
        return 48 * 1024 * 1024      # v5e / v6e: 128 MiB physical VMEM
    return 32 * 1024 * 1024          # v7x (64 MiB physical) or unknown


def multi_scale_loss(pred_flow, true_flow, *, tile_h=None):
    """Pallas implementation of MultiScaleLoss.forward. Returns a scalar."""
    assert pred_flow.shape == true_flow.shape
    b, c, h, w = pred_flow.shape
    assert h >= 2 and w >= 2, "gradient loss requires H >= 2 and W >= 2"

    bc = b * c
    wp = pl.cdiv(w, 128) * 128                 # lane-dense padded width

    # --- H tile size: multiple of 8, ~1 MiB (f32) per input block. ---
    h8 = pl.cdiv(h, 8) * 8
    if tile_h is None:
        th_target = max(8, min(512, ((1 << 20) // (wp * 4)) // 8 * 8))
    else:
        th_target = max(8, (int(tile_h) // 8) * 8)
    n_t = pl.cdiv(h8, th_target)
    th = pl.cdiv(pl.cdiv(h8, n_t), 8) * 8
    hp = th * n_t                              # padded height

    pred = pred_flow.reshape(bc, h, w)
    true = true_flow.reshape(bc, h, w)
    if (hp, wp) != (h, w):
        # Zero padding (in the input dtype); padded entries contribute 0.
        pad = ((0, 0), (0, hp - h), (0, wp - w))
        pred = jnp.pad(pred, pad)
        true = jnp.pad(true, pad)

    # Normalizers and the 0.01 gradient weight, folded into the kernel.
    w_sl1 = 1.0 / float(bc * h * w)
    w_gx = 0.01 / float(bc * h * (w - 1))
    w_gy = 0.01 / float(bc * (h - 1) * w)

    th8 = th // 8
    n_hblk8 = hp // 8                          # number of 8-row blocks in H

    partials = pl.pallas_call(
        _make_loss_kernel(th, wp, h, w, w_sl1, w_gx, w_gy),
        out_shape=jax.ShapeDtypeStruct((bc, n_t, 8, wp), jnp.float32),
        grid=(bc, n_t),
        in_specs=[
            pl.BlockSpec((1, th, wp), lambda i, t: (i, t, 0)),
            pl.BlockSpec((1, th, wp), lambda i, t: (i, t, 0)),
            # 8-row halo = first rows of the next tile (clamped for the last
            # tile, whose seam is masked out inside the kernel anyway).
            pl.BlockSpec((1, 8, wp),
                         lambda i, t: (i, jnp.minimum((t + 1) * th8, n_hblk8 - 1), 0)),
            pl.BlockSpec((1, 8, wp),
                         lambda i, t: (i, jnp.minimum((t + 1) * th8, n_hblk8 - 1), 0)),
        ],
        out_specs=pl.BlockSpec((1, 1, 8, wp), lambda i, t: (i, t, 0, 0)),
        compiler_params=pltpu.CompilerParams(
            dimension_semantics=("parallel", "parallel"),
            vmem_limit_bytes=_pick_vmem_limit(),
        ),
    )(pred, true, pred, true)

    # Weights already folded in-kernel; the loss is just the total sum.
    return jnp.sum(partials)


def _reference_loss(pred, tgt):
    """Pure-JAX reference mirroring the PyTorch module (for self-check)."""
    diff = jnp.abs(pred - tgt)
    sl1 = jnp.where(diff < 1.0, 0.5 * diff ** 2, diff - 0.5).mean()
    pgx = jnp.abs(pred[:, :, :, :-1] - pred[:, :, :, 1:])
    pgy = jnp.abs(pred[:, :, :-1, :] - pred[:, :, 1:, :])
    tgx = jnp.abs(tgt[:, :, :, :-1] - tgt[:, :, :, 1:])
    tgy = jnp.abs(tgt[:, :, :-1, :] - tgt[:, :, 1:, :])
    grad = jnp.abs(pgx - tgx).mean() + jnp.abs(pgy - tgy).mean()
    return sl1 + 0.01 * grad


if __name__ == "__main__":
    key = jax.random.PRNGKey(0)
    k1, k2, k3, k4 = jax.random.split(key, 4)

    loss_fn = jax.jit(multi_scale_loss, static_argnames=("tile_h",))

    # Case 1: shapes implied by the module (batch, 2, H, W); single H tile,
    # W padded up to 128 (exercises wrap + pad-column masking).
    B, C, H, W = 2, 2, 16, 16
    pred_flow = jax.random.normal(k1, (B, C, H, W), dtype=jnp.float32)
    true_flow = jax.random.normal(k2, (B, C, H, W), dtype=jnp.float32)
    loss1 = jax.block_until_ready(loss_fn(pred_flow, true_flow))
    ref1 = _reference_loss(pred_flow, true_flow)
    assert jnp.allclose(loss1, ref1, rtol=1e-5, atol=1e-5), (loss1, ref1)

    # Case 2: lane-aligned W (wp == w, wrap column masking path) plus a forced
    # small H tile so the multi-tile grid and the y-gradient seam are exercised.
    pred2 = jax.random.normal(k3, (1, 2, 24, 128), dtype=jnp.float32)
    true2 = jax.random.normal(k4, (1, 2, 24, 128), dtype=jnp.float32)
    loss2 = jax.block_until_ready(loss_fn(pred2, true2, tile_h=8))
    ref2 = _reference_loss(pred2, true2)
    assert jnp.allclose(loss2, ref2, rtol=1e-5, atol=1e-5), (loss2, ref2)

    print("KERNEL_OK")
</pallas_src>

<mosaic_0001>
module attributes {stable_mosaic.version = 11 : i64} {
  func.func @kernel(%arg0: i32, %arg1: i32, %arg2: memref<1x16x128xf32, #tpu.memory_space<vmem>>, %arg3: memref<1x16x128xf32, #tpu.memory_space<vmem>>, %arg4: memref<1x8x128xf32, #tpu.memory_space<vmem>>, %arg5: memref<1x8x128xf32, #tpu.memory_space<vmem>>, %arg6: memref<1x1x8x128xf32, #tpu.memory_space<vmem>>) attributes {dimension_semantics = [#tpu.dimension_semantics<parallel>, #tpu.dimension_semantics<parallel>], iteration_bounds = array<i64: 4, 1>, scalar_prefetch = 0 : i64, scratch_operands = 0 : i64, tpu.core_type = #tpu.core_type<tc>, window_params = [{transform_indices = @transform_0, window_bounds = array<i64: 1, 16, 128>}, {transform_indices = @transform_1, window_bounds = array<i64: 1, 16, 128>}, {transform_indices = @transform_2, window_bounds = array<i64: 1, 8, 128>}, {transform_indices = @transform_3, window_bounds = array<i64: 1, 8, 128>}, {transform_indices = @transform_4, window_bounds = array<i64: 1, 1, 8, 128>}]} {
    %c0 = arith.constant 0 : index
    %c0_0 = arith.constant 0 : index
    %c0_1 = arith.constant 0 : index
    %0 = vector.load %arg2[%c0, %c0_0, %c0_1] : memref<1x16x128xf32, #tpu.memory_space<vmem>>, vector<1x16x128xf32>
    %1 = vector.shape_cast %0 : vector<1x16x128xf32> to vector<16x128xf32>
    %c0_2 = arith.constant 0 : index
    %c0_3 = arith.constant 0 : index
    %c0_4 = arith.constant 0 : index
    %2 = vector.load %arg3[%c0_2, %c0_3, %c0_4] : memref<1x16x128xf32, #tpu.memory_space<vmem>>, vector<1x16x128xf32>
    %3 = vector.shape_cast %2 : vector<1x16x128xf32> to vector<16x128xf32>
    %4 = arith.subf %1, %3 : vector<16x128xf32>
    %5 = math.absf %4 : vector<16x128xf32>
    %cst = arith.constant 1.000000e+00 : f32
    %6 = vector.broadcast %cst : f32 to vector<16x128xf32>
    %7 = arith.cmpf olt, %5, %6 : vector<16x128xf32>
    %cst_5 = arith.constant 5.000000e-01 : f32
    %8 = vector.broadcast %cst_5 : f32 to vector<16x128xf32>
    %9 = arith.mulf %8, %5 : vector<16x128xf32>
    %10 = arith.mulf %9, %5 : vector<16x128xf32>
    %cst_6 = arith.constant 5.000000e-01 : f32
    %11 = vector.broadcast %cst_6 : f32 to vector<16x128xf32>
    %12 = arith.subf %5, %11 : vector<16x128xf32>
    %13 = arith.select %7, %10, %12 : vector<16x128xi1>, vector<16x128xf32>
    %c127_i32 = arith.constant 127 : i32
    %14 = tpu.dynamic_rotate %1 by %c127_i32 dim 1 : vector<16x128xf32>, i32 -> vector<16x128xf32>
    %c127_i32_7 = arith.constant 127 : i32
    %15 = tpu.dynamic_rotate %3 by %c127_i32_7 dim 1 : vector<16x128xf32>, i32 -> vector<16x128xf32>
    %16 = arith.subf %1, %14 : vector<16x128xf32>
    %17 = math.absf %16 : vector<16x128xf32>
    %18 = arith.subf %3, %15 : vector<16x128xf32>
    %19 = math.absf %18 : vector<16x128xf32>
    %20 = arith.subf %17, %19 : vector<16x128xf32>
    %21 = math.absf %20 : vector<16x128xf32>
    %22 = tpu.iota {dimensions = array<i32: 1>} : vector<1x128xi32>
    %c15_i32 = arith.constant 15 : i32
    %23 = vector.broadcast %c15_i32 : i32 to vector<1x128xi32>
    %24 = arith.cmpi slt, %22, %23 : vector<1x128xi32>
    %cst_8 = arith.constant 1.04166666E-5 : f32
    %cst_9 = arith.constant 0.000000e+00 : f32
    %25 = vector.broadcast %cst_8 : f32 to vector<1x128xf32>
    %26 = vector.broadcast %cst_9 : f32 to vector<1x128xf32>
    %27 = arith.select %24, %25, %26 : vector<1x128xi1>, vector<1x128xf32>
    %c15_i32_10 = arith.constant 15 : i32
    %28 = tpu.dynamic_rotate %1 by %c15_i32_10 dim 0 : vector<16x128xf32>, i32 -> vector<16x128xf32>
    %c15_i32_11 = arith.constant 15 : i32
    %29 = tpu.dynamic_rotate %3 by %c15_i32_11 dim 0 : vector<16x128xf32>, i32 -> vector<16x128xf32>
    %30 = arith.subf %1, %28 : vector<16x128xf32>
    %31 = math.absf %30 : vector<16x128xf32>
    %32 = arith.subf %3, %29 : vector<16x128xf32>
    %33 = math.absf %32 : vector<16x128xf32>
    %34 = arith.subf %31, %33 : vector<16x128xf32>
    %35 = math.absf %34 : vector<16x128xf32>
    %36 = tpu.iota {dimensions = array<i32: 0>} : vector<16x1xi32>
    %c16_i32 = arith.constant 16 : i32
    %37 = arith.muli %arg1, %c16_i32 : i32
    %38 = vector.broadcast %37 : i32 to vector<16x1xi32>
    %39 = arith.addi %36, %38 : vector<16x1xi32>
    %c15_i32_12 = arith.constant 15 : i32
    %40 = vector.broadcast %c15_i32_12 : i32 to vector<16x1xi32>
    %41 = arith.cmpi slt, %39, %40 : vector<16x1xi32>
    %c15_i32_13 = arith.constant 15 : i32
    %42 = vector.broadcast %c15_i32_13 : i32 to vector<16x1xi32>
    %43 = arith.cmpi slt, %36, %42 : vector<16x1xi32>
    %44 = arith.andi %41, %43 : vector<16x1xi1>
    %cst_14 = arith.constant 1.04166666E-5 : f32
    %cst_15 = arith.constant 0.000000e+00 : f32
    %45 = vector.broadcast %cst_14 : f32 to vector<16x1xf32>
    %46 = vector.broadcast %cst_15 : f32 to vector<16x1xf32>
    %47 = arith.select %44, %45, %46 : vector<16x1xi1>, vector<16x1xf32>
    %cst_16 = arith.constant 9.765625E-4 : f32
    %48 = vector.broadcast %cst_16 : f32 to vector<16x128xf32>
    %49 = arith.mulf %48, %13 : vector<16x128xf32>
    %50 = vector.broadcast %27 : vector<1x128xf32> to vector<16x128xf32>
    %51 = arith.mulf %21, %50 : vector<16x128xf32>
    %52 = arith.addf %49, %51 : vector<16x128xf32>
    %53 = vector.broadcast %47 : vector<16x1xf32> to vector<16x128xf32>
    %54 = arith.mulf %35, %53 : vector<16x128xf32>
    %55 = arith.addf %52, %54 : vector<16x128xf32>
    %56 = vector.extract_strided_slice %55 {offsets = [0, 0], sizes = [8, 128], strides = [1, 1]} : vector<16x128xf32> to vector<8x128xf32>
    %57 = vector.extract_strided_slice %55 {offsets = [8, 0], sizes = [8, 128], strides = [1, 1]} : vector<16x128xf32> to vector<8x128xf32>
    %58 = arith.addf %56, %57 : vector<8x128xf32>
    %c0_17 = arith.constant 0 : index
    %c0_18 = arith.constant 0 : index
    %c0_19 = arith.constant 0 : index
    %c0_20 = arith.constant 0 : index
    %59 = vector.load %arg6[%c0_17, %c0_18, %c0_19, %c0_20] : memref<1x1x8x128xf32, #tpu.memory_space<vmem>>, vector<1x1x8x128xf32>
    %60 = vector.shape_cast %59 : vector<1x1x8x128xf32> to vector<8x128xf32>
    %61 = vector.shape_cast %58 : vector<8x128xf32> to vector<1x1x8x128xf32>
    tpu.vector_store %arg6[%c0_17, %c0_18, %c0_19, %c0_20], %61 {strides = array<i32>} : memref<1x1x8x128xf32, #tpu.memory_space<vmem>>, vector<1x1x8x128xf32>,
    %62 = vector.extract_strided_slice %1 {offsets = [15, 0], sizes = [1, 128], strides = [1, 1]} : vector<16x128xf32> to vector<1x128xf32>
    %63 = vector.extract_strided_slice %3 {offsets = [15, 0], sizes = [1, 128], strides = [1, 1]} : vector<16x128xf32> to vector<1x128xf32>
    %c0_21 = arith.constant 0 : index
    %c0_22 = arith.constant 0 : index
    %c0_23 = arith.constant 0 : index
    %64 = vector.load %arg4[%c0_21, %c0_22, %c0_23] : memref<1x8x128xf32, #tpu.memory_space<vmem>>, vector<1x1x128xf32>
    %65 = vector.shape_cast %64 : vector<1x1x128xf32> to vector<1x128xf32>
    %c0_24 = arith.constant 0 : index
    %c0_25 = arith.constant 0 : index
    %c0_26 = arith.constant 0 : index
    %66 = vector.load %arg5[%c0_24, %c0_25, %c0_26] : memref<1x8x128xf32, #tpu.memory_space<vmem>>, vector<1x1x128xf32>
    %67 = vector.shape_cast %66 : vector<1x1x128xf32> to vector<1x128xf32>
    %68 = arith.subf %62, %65 : vector<1x128xf32>
    %69 = math.absf %68 : vector<1x128xf32>
    %70 = arith.subf %63, %67 : vector<1x128xf32>
    %71 = math.absf %70 : vector<1x128xf32>
    %72 = arith.subf %69, %71 : vector<1x128xf32>
    %73 = math.absf %72 : vector<1x128xf32>
    %c1_i32 = arith.constant 1 : i32
    %74 = arith.addi %arg1, %c1_i32 : i32
    %c16_i32_27 = arith.constant 16 : i32
    %75 = arith.muli %74, %c16_i32_27 : i32
    %c16_i32_28 = arith.constant 16 : i32
    %76 = arith.cmpi slt, %75, %c16_i32_28 : i32
    %cst_29 = arith.constant 1.04166666E-5 : f32
    %cst_30 = arith.constant 0.000000e+00 : f32
    %77 = arith.select %76, %cst_29, %cst_30 : f32
    %c0_31 = arith.constant 0 : index
    %c0_32 = arith.constant 0 : index
    %c0_33 = arith.constant 0 : index
    %c0_34 = arith.constant 0 : index
    %78 = vector.load %arg6[%c0_31, %c0_32, %c0_33, %c0_34] : memref<1x1x8x128xf32, #tpu.memory_space<vmem>>, vector<1x1x1x128xf32>
    %79 = vector.shape_cast %78 : vector<1x1x1x128xf32> to vector<1x128xf32>
    %80 = vector.broadcast %77 : f32 to vector<1x128xf32>
    %81 = arith.mulf %73, %80 : vector<1x128xf32>
    %82 = arith.addf %79, %81 : vector<1x128xf32>
    %c0_35 = arith.constant 0 : index
    %c0_36 = arith.constant 0 : index
    %c0_37 = arith.constant 0 : index
    %c0_38 = arith.constant 0 : index
    %83 = vector.load %arg6[%c0_35, %c0_36, %c0_37, %c0_38] : memref<1x1x8x128xf32, #tpu.memory_space<vmem>>, vector<1x1x1x128xf32>
    %84 = vector.shape_cast %83 : vector<1x1x1x128xf32> to vector<1x128xf32>
    %85 = vector.shape_cast %82 : vector<1x128xf32> to vector<1x1x1x128xf32>
    tpu.vector_store %arg6[%c0_35, %c0_36, %c0_37, %c0_38], %85 {strides = array<i32>} : memref<1x1x8x128xf32, #tpu.memory_space<vmem>>, vector<1x1x1x128xf32>,
    return
  }
  func.func @transform_0(%arg0: i32, %arg1: i32) -> (i32, i32, i32) {
    %c0_i32 = arith.constant 0 : i32
    %c0_i32_0 = arith.constant 0 : i32
    return %arg0, %arg1, %c0_i32 : i32, i32, i32
  }
  func.func @transform_1(%arg0: i32, %arg1: i32) -> (i32, i32, i32) {
    %c0_i32 = arith.constant 0 : i32
    %c0_i32_0 = arith.constant 0 : i32
    return %arg0, %arg1, %c0_i32 : i32, i32, i32
  }
  func.func @transform_2(%arg0: i32, %arg1: i32) -> (i32, i32, i32) {
    %c1_i32 = arith.constant 1 : i32
    %0 = arith.addi %arg1, %c1_i32 : i32
    %c2_i32 = arith.constant 2 : i32
    %1 = arith.muli %0, %c2_i32 : i32
    %c1_i32_0 = arith.constant 1 : i32
    %2 = arith.minsi %1, %c1_i32_0 : i32
    %c0_i32 = arith.constant 0 : i32
    %c0_i32_1 = arith.constant 0 : i32
    return %arg0, %2, %c0_i32 : i32, i32, i32
  }
  func.func @transform_3(%arg0: i32, %arg1: i32) -> (i32, i32, i32) {
    %c1_i32 = arith.constant 1 : i32
    %0 = arith.addi %arg1, %c1_i32 : i32
    %c2_i32 = arith.constant 2 : i32
    %1 = arith.muli %0, %c2_i32 : i32
    %c1_i32_0 = arith.constant 1 : i32
    %2 = arith.minsi %1, %c1_i32_0 : i32
    %c0_i32 = arith.constant 0 : i32
    %c0_i32_1 = arith.constant 0 : i32
    return %arg0, %2, %c0_i32 : i32, i32, i32
  }
  func.func @transform_4(%arg0: i32, %arg1: i32) -> (i32, i32, i32, i32) {
    %c0_i32 = arith.constant 0 : i32
    %c0_i32_0 = arith.constant 0 : i32
    %c0_i32_1 = arith.constant 0 : i32
    return %arg0, %arg1, %c0_i32, %c0_i32_0 : i32, i32, i32, i32
  }
}

</mosaic_0001>

<llo_original>
// kernel: multi_scale_loss.1
$region0: #{multi_scale_loss.1}
  #allocation0 [shape = 'u32[]', space=smem, size = 0x4, offset = 0x4, fixed_abs, tag = 'smem constant byte address 0x4 - core index']
  #allocation1 [shape = 'u32[144,128]{1,0:T(1,128)}', space=vmem, size = 0x12000, scoped, tag = 'internal scratch']
  %s0 = inlined_call_operand.vmem [shape: f32[4,16,128], index: 0, kind: input, shape index: {}, may-alias: {0,2}]
  %s1 = inlined_call_operand.vmem [shape: f32[4,16,128], index: 1, kind: input, shape index: {}, may-alias: {1,3}]
  %s2 = inlined_call_operand.vmem [shape: f32[4,16,128], index: 2, kind: input, shape index: {}, may-alias: {0,2}]
  %s3 = inlined_call_operand.vmem [shape: f32[4,16,128], index: 3, kind: input, shape index: {}, may-alias: {1,3}]
  %s4 = inlined_call_operand.vmem [shape: f32[4,1,8,128], index: 4, kind: output, shape index: {}]
  %s5 = sld [smem:[#allocation0]]
  $region49: #{multi_scale_loss.1} parent=0
    _
  %s7 = ssub.s32 1, %s5
  %s8 = scalar_select 0, %s7, %s5
  loop: start=0, step=1, limit=6
  $region2: #{multi_scale_loss.1} parent=0 // loop_pre_header
    _
  $region3: #{multi_scale_loss.1} parent=0 // loop_header
    %s10 = sphi 0, %s14
    %p11 = scmp.ge.s32.totalorder %s10, 6
    %s17 = sphi 0, %s29
    %s18 = sphi 0, %s25
    %s19 = sphi 0, %s17
    %s20 = sphi 0, %s18
    %s21 = sphi 0, %s19
    %s22 = sphi 0, %s20
    %s34 = sphi 0, %s36
    %s37 = sphi 0, %s34
    %s38 = sphi 0, %s37
    %s54 = sphi 0, %s38
    %s62 = sphi 0, %s64
    %s65 = sphi 0, %s62
    %s66 = sphi 0, %s65
    %s82 = sphi 0, %s66
    %s98 = sphi 0, %s100
    %s101 = sphi 0, %s98
    %s102 = sphi 0, %s101
    %s118 = sphi 0, %s102
    %s134 = sphi 0, %s136
    %s137 = sphi 0, %s134
    %s138 = sphi 0, %s137
    %s154 = sphi 0, %s138
    %s162 = sphi 0, %s164
    %s165 = sphi 0, %s162
    %s166 = sphi 0, %s165
    %s182 = sphi 0, %s166
  $region4: #{multi_scale_loss.1} parent=0 // loop_header_branch
    %13 = sbr.rel (%p11) target = $region8
  $region5: #{multi_scale_loss.1} parent=0 // loop_body
    %s15 = ssub.s32 %s10, 1
    %s16 = ssub.s32 %s10, 2
    %s23 = sadd.s32 1, %s18
    %p24 = scmp.ge.s32.totalorder %s23, 1
    %s25 = scalar_select %p24, 0, %s23
    %s26 = sadd.s32 1, %s17
    %s27 = scalar_select %p24, %s26, %s17
    %p28 = scmp.ge.s32.totalorder %s27, 4
    %s29 = scalar_select %p28, 0, %s27
    %s30 = ssub.s32 %s17, %s29
    %s31 = ssub.s32 %s18, %s25
    %s32 = sor.u32 %s30, %s31
    %p33 = scmp.eq.s32.totalorder %s32, 0
    %s35 = sadd.s32 %s34, 1
    %s36 = scalar_select %p33, %s34, %s35
    %p39 = pneg %p33
    %p40 = scmp.eq.s32.totalorder %s10, 3
    %p41 = por %p39, %p40
    %p42 = scmp.ne.s32.totalorder %s34, %s37
    %p43 = scmp.eq.s32.totalorder %s10, 0
    %p44 = por %p42, %p43
    %p45 = scmp.ne.s32.totalorder %s34, %s37
    %p46 = scmp.eq.s32.totalorder %s15, 3
    %p47 = por %p45, %p46
    %p48 = scmp.ne.s32.totalorder %s37, %s38
    %p49 = scmp.eq.s32.totalorder %s15, 0
    %p50 = por %p48, %p49
    %p51 = scmp.ne.s32.totalorder %s37, %s38
    %p52 = scmp.eq.s32.totalorder %s16, 3
    %p53 = por %p51, %p52
    %p55 = scmp.ne.s32.totalorder %s38, %s54
    %p56 = scmp.eq.s32.totalorder %s16, 0
    %p57 = por %p55, %p56
    %s58 = ssub.s32 %s17, %s29
    %s59 = ssub.s32 %s18, %s25
    %s60 = sor.u32 %s58, %s59
    %p61 = scmp.eq.s32.totalorder %s60, 0
    %s63 = sadd.s32 %s62, 1
    %s64 = scalar_select %p61, %s62, %s63
    %p67 = pneg %p61
    %p68 = scmp.eq.s32.totalorder %s10, 3
    %p69 = por %p67, %p68
    %p70 = scmp.ne.s32.totalorder %s62, %s65
    %p71 = scmp.eq.s32.totalorder %s10, 0
    %p72 = por %p70, %p71
    %p73 = scmp.ne.s32.totalorder %s62, %s65
    %p74 = scmp.eq.s32.totalorder %s15, 3
    %p75 = por %p73, %p74
    %p76 = scmp.ne.s32.totalorder %s65, %s66
    %p77 = scmp.eq.s32.totalorder %s15, 0
    %p78 = por %p76, %p77
    %p79 = scmp.ne.s32.totalorder %s65, %s66
    %p80 = scmp.eq.s32.totalorder %s16, 3
    %p81 = por %p79, %p80
    %p83 = scmp.ne.s32.totalorder %s66, %s82
    %p84 = scmp.eq.s32.totalorder %s16, 0
    %p85 = por %p83, %p84
    %s86 = sadd.s32 %s18, 1
    %s87 = smul.u32 %s86, 2
    %p88 = scmp.lt.s32.totalorder %s87, 1
    %s89 = scalar_select %p88, %s87, 1
    %s90 = sadd.s32 %s25, 1
    %s91 = smul.u32 %s90, 2
    %p92 = scmp.lt.s32.totalorder %s91, 1
    %s93 = scalar_select %p92, %s91, 1
    %s94 = ssub.s32 %s17, %s29
    %s95 = ssub.s32 %s89, %s93
    %s96 = sor.u32 %s94, %s95
    %p97 = scmp.eq.s32.totalorder %s96, 0
    %s99 = sadd.s32 %s98, 1
    %s100 = scalar_select %p97, %s98, %s99
    %p103 = pneg %p97
    %p104 = scmp.eq.s32.totalorder %s10, 3
    %p105 = por %p103, %p104
    %p106 = scmp.ne.s32.totalorder %s98, %s101
    %p107 = scmp.eq.s32.totalorder %s10, 0
    %p108 = por %p106, %p107
    %p109 = scmp.ne.s32.totalorder %s98, %s101
    %p110 = scmp.eq.s32.totalorder %s15, 3
    %p111 = por %p109, %p110
    %p112 = scmp.ne.s32.totalorder %s101, %s102
    %p113 = scmp.eq.s32.totalorder %s15, 0
    %p114 = por %p112, %p113
    %p115 = scmp.ne.s32.totalorder %s101, %s102
    %p116 = scmp.eq.s32.totalorder %s16, 3
    %p117 = por %p115, %p116
    %p119 = scmp.ne.s32.totalorder %s102, %s118
    %p120 = scmp.eq.s32.totalorder %s16, 0
    %p121 = por %p119, %p120
    %s122 = sadd.s32 %s18, 1
    %s123 = smul.u32 %s122, 2
    %p124 = scmp.lt.s32.totalorder %s123, 1
    %s125 = scalar_select %p124, %s123, 1
    %s126 = sadd.s32 %s25, 1
    %s127 = smul.u32 %s126, 2
    %p128 = scmp.lt.s32.totalorder %s127, 1
    %s129 = scalar_select %p128, %s127, 1
    %s130 = ssub.s32 %s17, %s29
    %s131 = ssub.s32 %s125, %s129
    %s132 = sor.u32 %s130, %s131
    %p133 = scmp.eq.s32.totalorder %s132, 0
    %s135 = sadd.s32 %s134, 1
    %s136 = scalar_select %p133, %s134, %s135
    %p139 = pneg %p133
    %p140 = scmp.eq.s32.totalorder %s10, 3
    %p141 = por %p139, %p140
    %p142 = scmp.ne.s32.totalorder %s134, %s137
    %p143 = scmp.eq.s32.totalorder %s10, 0
    %p144 = por %p142, %p143
    %p145 = scmp.ne.s32.totalorder %s134, %s137
    %p146 = scmp.eq.s32.totalorder %s15, 3
    %p147 = por %p145, %p146
    %p148 = scmp.ne.s32.totalorder %s137, %s138
    %p149 = scmp.eq.s32.totalorder %s15, 0
    %p150 = por %p148, %p149
    %p151 = scmp.ne.s32.totalorder %s137, %s138
    %p152 = scmp.eq.s32.totalorder %s16, 3
    %p153 = por %p151, %p152
    %p155 = scmp.ne.s32.totalorder %s138, %s154
    %p156 = scmp.eq.s32.totalorder %s16, 0
    %p157 = por %p155, %p156
    %s158 = ssub.s32 %s17, %s29
    %s159 = ssub.s32 %s18, %s25
    %s160 = sor.u32 %s158, %s159
    %p161 = scmp.eq.s32.totalorder %s160, 0
    %s163 = sadd.s32 %s162, 1
    %s164 = scalar_select %p161, %s162, %s163
    %p167 = pneg %p161
    %p168 = scmp.eq.s32.totalorder %s10, 3
    %p169 = por %p167, %p168
    %p170 = scmp.ne.s32.totalorder %s162, %s165
    %p171 = scmp.eq.s32.totalorder %s10, 0
    %p172 = por %p170, %p171
    %p173 = scmp.ne.s32.totalorder %s162, %s165
    %p174 = scmp.eq.s32.totalorder %s15, 3
    %p175 = por %p173, %p174
    %p176 = scmp.ne.s32.totalorder %s165, %s166
    %p177 = scmp.eq.s32.totalorder %s15, 0
    %p178 = por %p176, %p177
    %p179 = scmp.ne.s32.totalorder %s165, %s166
    %p180 = scmp.eq.s32.totalorder %s16, 3
    %p181 = por %p179, %p180
    %p183 = scmp.ne.s32.totalorder %s166, %s182
    %p184 = scmp.eq.s32.totalorder %s16, 0
    %p185 = por %p183, %p184
    %p186 = scmp.le.s32.totalorder 1, %s10
    %p187 = scmp.lt.s32.totalorder %s10, 5
    %p188 = pnand %p186, %p187
    %p189 = pneg %p188
    // Predicated region
    $region9: #{multi_scale_loss.1} parent=5 // pred_check
      _
    $region10: #{multi_scale_loss.1} parent=5 // pred_check_branch
      %191 = sbr.rel (%p188) target = $region12
    $region11: #{multi_scale_loss.1} parent=5 // pred_region
      %s192 = ssub.s32 %s10, 1
    $region12: #{multi_scale_loss.1} parent=5 // pred_fallthru
      _
    %p193 = scmp.lt.s32.totalorder %s10, 4
    // Predicated region
    $region13: #{multi_scale_loss.1} parent=5 // pred_check
      %p194 = pneg %p193
    $region14: #{multi_scale_loss.1} parent=5 // pred_check_branch
      %196 = sbr.rel (%p194) target = $region16
    $region15: #{multi_scale_loss.1} parent=5 // pred_region
      // Predicated region
      $region17: #{multi_scale_loss.1} parent=15 // pred_check
        %p197 = pneg %p44
      $region18: #{multi_scale_loss.1} parent=15 // pred_check_branch
        %199 = sbr.rel (%p197) target = $region20
      $region19: #{multi_scale_loss.1} parent=15 // pred_region
        %s200 = smul.u32 2, %s18
        %p201 = scmp.lt.s32.totalorder %s17, 3
        %s202 = scalar_select %p201, %s17, 3
        %p203 = scmp.lt.s32.totalorder %s200, 1
        %s204 = scalar_select %p203, %s200, 1
        %s205 = smul.addr %s202, 2
        %s206 = sadd.s32 %s204, %s205
        %s207 = smul.addr %s206, 8
        %s208 = scalar_lea.vmem %s0, %s207
        %s209 = smul.u32 2, %s18
      $region20: #{multi_scale_loss.1} parent=15 // pred_fallthru
        _
      // Predicated region
      $region21: #{multi_scale_loss.1} parent=15 // pred_check
        %p210 = pneg %p72
      $region22: #{multi_scale_loss.1} parent=15 // pred_check_branch
        %212 = sbr.rel (%p210) target = $region24
      $region23: #{multi_scale_loss.1} parent=15 // pred_region
        %s213 = smul.u32 2, %s18
        %p214 = scmp.lt.s32.totalorder %s17, 3
        %s215 = scalar_select %p214, %s17, 3
        %p216 = scmp.lt.s32.totalorder %s213, 1
        %s217 = scalar_select %p216, %s213, 1
        %s218 = smul.addr %s215, 2
        %s219 = sadd.s32 %s217, %s218
        %s220 = smul.addr %s219, 8
        %s221 = scalar_lea.vmem %s1, %s220
        %s222 = smul.u32 2, %s18
      $region24: #{multi_scale_loss.1} parent=15 // pred_fallthru
        _
      // Predicated region
      $region25: #{multi_scale_loss.1} parent=15 // pred_check
        %p223 = pneg %p108
      $region26: #{multi_scale_loss.1} parent=15 // pred_check_branch
        %225 = sbr.rel (%p223) target = $region28
      $region27: #{multi_scale_loss.1} parent=15 // pred_region
        %s226 = sadd.s32 %s18, 1
        %s227 = smul.u32 %s226, 2
        %p228 = scmp.lt.s32.totalorder %s227, 1
        %s229 = scalar_select %p228, %s227, 1
        %p230 = scmp.lt.s32.totalorder %s17, 3
        %s231 = scalar_select %p230, %s17, 3
        %p232 = scmp.lt.s32.totalorder %s229, 1
        %s233 = scalar_select %p232, %s229, 1
        %s234 = smul.addr %s231, 2
        %s235 = sadd.s32 %s233, %s234
        %s236 = smul.addr %s235, 8
        %s237 = scalar_lea.vmem %s2, %s236
        %s238 = sadd.s32 %s18, 1
        %s239 = smul.u32 %s238, 2
        %p240 = scmp.lt.s32.totalorder %s239, 1
        %s241 = scalar_select %p240, %s239, 1
      $region28: #{multi_scale_loss.1} parent=15 // pred_fallthru
        _
      // Predicated region
      $region29: #{multi_scale_loss.1} parent=15 // pred_check
        %p242 = pneg %p144
      $region30: #{multi_scale_loss.1} parent=15 // pred_check_branch
        %244 = sbr.rel (%p242) target = $region32
      $region31: #{multi_scale_loss.1} parent=15 // pred_region
        %s245 = sadd.s32 %s18, 1
        %s246 = smul.u32 %s245, 2
        %p247 = scmp.lt.s32.totalorder %s246, 1
        %s248 = scalar_select %p247, %s246, 1
        %p249 = scmp.lt.s32.totalorder %s17, 3
        %s250 = scalar_select %p249, %s17, 3
        %p251 = scmp.lt.s32.totalorder %s248, 1
        %s252 = scalar_select %p251, %s248, 1
        %s253 = smul.addr %s250, 2
        %s254 = sadd.s32 %s252, %s253
        %s255 = smul.addr %s254, 8
        %s256 = scalar_lea.vmem %s3, %s255
        %s257 = sadd.s32 %s18, 1
        %s258 = smul.u32 %s257, 2
        %p259 = scmp.lt.s32.totalorder %s258, 1
        %s260 = scalar_select %p259, %s258, 1
      $region32: #{multi_scale_loss.1} parent=15 // pred_fallthru
        _
    $region16: #{multi_scale_loss.1} parent=5 // pred_fallthru
      _
    %p261 = scmp.le.s32.totalorder 1, %s10
    %p262 = scmp.lt.s32.totalorder %s10, 5
    %p263 = pnand %p261, %p262
    %p264 = pneg %p263
    // Predicated region
    $region33: #{multi_scale_loss.1} parent=5 // pred_check
      _
    $region34: #{multi_scale_loss.1} parent=5 // pred_check_branch
      %266 = sbr.rel (%p263) target = $region36
    $region35: #{multi_scale_loss.1} parent=5 // pred_region
      %s267 = ssub.s32 %s10, 1
      %s268 = smul.u32 2, %s20
      %p269 = scmp.lt.s32.totalorder %s19, 3
      %s270 = scalar_select %p269, %s19, 3
      %p271 = scmp.lt.s32.totalorder %s268, 1
      %s272 = scalar_select %p271, %s268, 1
      %s273 = smul.addr %s270, 2
      %s274 = sadd.s32 %s272, %s273
      %s275 = smul.addr %s274, 8
      %s276 = scalar_lea.vmem %s0, %s275
      %p277 = pneg %p50
      %p278 = pneg %p47
      %s279 = smul.u32 2, %s20
      %p280 = scmp.lt.s32.totalorder %s19, 3
      %s281 = scalar_select %p280, %s19, 3
      %p282 = scmp.lt.s32.totalorder %s279, 1
      %s283 = scalar_select %p282, %s279, 1
      %s284 = smul.addr %s281, 2
      %s285 = sadd.s32 %s283, %s284
      %s286 = smul.addr %s285, 8
      %s287 = scalar_lea.vmem %s1, %s286
      %p288 = pneg %p78
      %p289 = pneg %p75
      %s290 = sadd.s32 %s20, 1
      %s291 = smul.u32 %s290, 2
      %p292 = scmp.lt.s32.totalorder %s291, 1
      %s293 = scalar_select %p292, %s291, 1
      %p294 = scmp.lt.s32.totalorder %s19, 3
      %s295 = scalar_select %p294, %s19, 3
      %p296 = scmp.lt.s32.totalorder %s293, 1
      %s297 = scalar_select %p296, %s293, 1
      %s298 = smul.addr %s295, 2
      %s299 = sadd.s32 %s297, %s298
      %s300 = smul.addr %s299, 8
      %s301 = scalar_lea.vmem %s2, %s300
      %p302 = pneg %p114
      %p303 = pneg %p111
      %s304 = sadd.s32 %s20, 1
      %s305 = smul.u32 %s304, 2
      %p306 = scmp.lt.s32.totalorder %s305, 1
      %s307 = scalar_select %p306, %s305, 1
      %p308 = scmp.lt.s32.totalorder %s19, 3
      %s309 = scalar_select %p308, %s19, 3
      %p310 = scmp.lt.s32.totalorder %s307, 1
      %s311 = scalar_select %p310, %s307, 1
      %s312 = smul.addr %s309, 2
      %s313 = sadd.s32 %s311, %s312
      %s314 = smul.addr %s313, 8
      %s315 = scalar_lea.vmem %s3, %s314
      %p316 = pneg %p150
      %p317 = pneg %p147
      %p318 = pneg %p178
      %p319 = pneg %p175
      %p320 = scmp.lt.s32.totalorder %s19, 3
      %s321 = scalar_select %p320, %s19, 3
      %p322 = scmp.lt.s32.totalorder %s20, 0
      %s323 = scalar_select %p322, %s20, 0
      %s324 = sadd.s32 %s323, %s321
      %s325 = smul.addr %s324, 8
      %s326 = scalar_lea.vmem %s4, %s325
      %s327 = smul.u32 2, %s20
      %p328 = scmp.lt.s32.totalorder %s19, 3
      %s329 = scalar_select %p328, %s19, 3
      %p330 = scmp.lt.s32.totalorder %s327, 1
      %s331 = scalar_select %p330, %s327, 1
      %s332 = smul.addr %s329, 2
      %s333 = sadd.s32 %s331, %s332
      %s334 = smul.addr %s333, 8
      %s335 = scalar_lea.vmem %s0, %s334
      %s336 = smul.u32 2, %s20
      %s337 = smul.u32 2, %s20
      %p338 = scmp.lt.s32.totalorder %s19, 3
      %s339 = scalar_select %p338, %s19, 3
      %p340 = scmp.lt.s32.totalorder %s337, 1
      %s341 = scalar_select %p340, %s337, 1
      %s342 = smul.addr %s339, 2
      %s343 = sadd.s32 %s341, %s342
      %s344 = smul.addr %s343, 8
      %s345 = scalar_lea.vmem %s1, %s344
      %s346 = smul.u32 2, %s20
      %s347 = sadd.s32 %s20, 1
      %s348 = smul.u32 %s347, 2
      %p349 = scmp.lt.s32.totalorder %s348, 1
      %s350 = scalar_select %p349, %s348, 1
      %p351 = scmp.lt.s32.totalorder %s19, 3
      %s352 = scalar_select %p351, %s19, 3
      %p353 = scmp.lt.s32.totalorder %s350, 1
      %s354 = scalar_select %p353, %s350, 1
      %s355 = smul.addr %s352, 2
      %s356 = sadd.s32 %s354, %s355
      %s357 = smul.addr %s356, 8
      %s358 = scalar_lea.vmem %s2, %s357
      %s359 = sadd.s32 %s20, 1
      %s360 = smul.u32 %s359, 2
      %p361 = scmp.lt.s32.totalorder %s360, 1
      %s362 = scalar_select %p361, %s360, 1
      %s363 = sadd.s32 %s20, 1
      %s364 = smul.u32 %s363, 2
      %p365 = scmp.lt.s32.totalorder %s364, 1
      %s366 = scalar_select %p365, %s364, 1
      %p367 = scmp.lt.s32.totalorder %s19, 3
      %s368 = scalar_select %p367, %s19, 3
      %p369 = scmp.lt.s32.totalorder %s366, 1
      %s370 = scalar_select %p369, %s366, 1
      %s371 = smul.addr %s368, 2
      %s372 = sadd.s32 %s370, %s371
      %s373 = smul.addr %s372, 8
      %s374 = scalar_lea.vmem %s3, %s373
      %s375 = sadd.s32 %s20, 1
      %s376 = smul.u32 %s375, 2
      %p377 = scmp.lt.s32.totalorder %s376, 1
      %s378 = scalar_select %p377, %s376, 1
      %p379 = scmp.lt.s32.totalorder %s19, 3
      %s380 = scalar_select %p379, %s19, 3
      %p381 = scmp.lt.s32.totalorder %s20, 0
      %s382 = scalar_select %p381, %s20, 0
      %s383 = sadd.s32 %s382, %s380
      %s384 = smul.addr %s383, 8
      %s385 = scalar_lea.vmem %s4, %s384
      %v386 = vld [vmem:[%s335] sm:$0xff]
      %v387 = vld [vmem:[%s335 + $0x8] sm:$0xff]
      %v388 = vld [vmem:[%s345] sm:$0xff]
      %v389 = vld [vmem:[%s345 + $0x8] sm:$0xff]
      %v390 = vsub.f32 %v386, %v388
      %v391 = vsub.f32 %v387, %v389
      %v392 = vand.u32 2147483647, %v390
      %v393 = vand.u32 2147483647, %v391
      %vm394 = vcmp.lt.f32.partialorder %v392, 1.0
      %vm395 = vcmp.lt.f32.partialorder %v393, 1.0
      %v396 = vmul.f32 %v392, 0.5
      %v397 = vmul.f32 %v393, 0.5
      %v398 = vmul.f32 %v396, %v392
      %v399 = vmul.f32 %v397, %v393
      %v400 = vsub.f32 %v392, 0.5
      %v401 = vsub.f32 %v393, 0.5
      %v402 = vsel %vm394, %v398, %v400
      %v403 = vsel %vm395, %v399, %v401
      %404 = vrot.lane.b32.xlu0 %v386, 127
      %v405 = vpop.permute.xlu0 %404
      %406 = vrot.lane.b32.xlu0 %v387, 127
      %v407 = vpop.permute.xlu0 %406
      %408 = vrot.lane.b32.xlu0 %v388, 127
      %v409 = vpop.permute.xlu0 %408
      %410 = vrot.lane.b32.xlu0 %v389, 127
      %v411 = vpop.permute.xlu0 %410
      %v412 = vsub.f32 %v386, %v405
      %v413 = vsub.f32 %v387, %v407
      %v414 = vand.u32 2147483647, %v412
      %v415 = vand.u32 2147483647, %v413
      %v416 = vsub.f32 %v388, %v409
      %v417 = vsub.f32 %v389, %v411
      %v418 = vand.u32 2147483647, %v416
      %v419 = vand.u32 2147483647, %v417
      %v420 = vsub.f32 %v414, %v418
      %v421 = vsub.f32 %v415, %v419
      %v422 = vand.u32 2147483647, %v420
      %v423 = vand.u32 2147483647, %v421
      %v424 = vlaneseq
      %v425 = vand.u32 %v424, 127
      %vm426 = vcmp.lt.s32.totalorder %v425, 15
      %v427 = vsel %vm426, 1.0416667e-05, 0.0
      %v428 = vrot.slane %v386, 1
      %v429 = vrot.slane %v387, 1
      %v430 = vlaneseq
      %v431 = vshrl.u32 %v430, 7
      %vm432 = vcmp.lt.s32.totalorder %v431, 7
      %v433 = vsel %vm432, %v428, %v429
      %v434 = vsel %vm432, %v429, %v428
      %v435 = vrot.slane %v388, 1
      %v436 = vrot.slane %v389, 1
      %v437 = vsel %vm432, %v435, %v436
      %v438 = vsel %vm432, %v436, %v435
      %v439 = vsub.f32 %v386, %v433
      %v440 = vsub.f32 %v387, %v434
      %v441 = vand.u32 2147483647, %v439
      %v442 = vand.u32 2147483647, %v440
      %v443 = vsub.f32 %v388, %v437
      %v444 = vsub.f32 %v389, %v438
      %v445 = vand.u32 2147483647, %v443
      %v446 = vand.u32 2147483647, %v444
      %v447 = vsub.f32 %v441, %v445
      %v448 = vsub.f32 %v442, %v446
      %v449 = vand.u32 2147483647, %v447
      %v450 = vand.u32 2147483647, %v448
      %v451 = vadd.s32 %v431, 8
      %s452 = smul.u32 %s20, 16
      %v453 = vstv %s452
      %v454 = vadd.s32 %v431, %v453
      %v455 = vadd.s32 %v451, %v453
      %vm456 = vcmp.lt.s32.totalorder %v454, 15
      %vm457 = vcmp.lt.s32.totalorder %v455, 15
      %vm458 = vcmp.lt.s32.totalorder %v431, 15
      %vm459 = vcmp.lt.s32.totalorder %v451, 15
      %vm460 = vmand %vm456, %vm458
      %vm461 = vmand %vm457, %vm459
      %v462 = vsel %vm460, 1.0416667e-05, 0.0
      %v463 = vsel %vm461, 1.0416667e-05, 0.0
      %v464 = vmul.f32 %v402, 0.0009765625
      %v465 = vmul.f32 %v403, 0.0009765625
      %v466 = vmul.f32 %v422, %v427
      %v467 = vmul.f32 %v423, %v427
      %v468 = vadd.f32 %v464, %v466
      %v469 = vadd.f32 %v465, %v467
      %v470 = vmul.f32 %v449, %v462
      %v471 = vmul.f32 %v450, %v463
      %v472 = vadd.f32 %v468, %v470
      %v473 = vadd.f32 %v469, %v471
      %v474 = vadd.f32 %v472, %v473
      %475 = vst [vmem:[%s385] sm:$0xff] %v474
      %v476 = vld [vmem:[%s358] sm:$0x1]
      %v477 = vld [vmem:[%s374] sm:$0x1]
      %v479 = vrot.slane %v476, 1
      %v481 = vsub.f32 %v387, %v479
      %v482 = vand.u32 2147483647, %v481
      %v484 = vrot.slane %v477, 1
      %v486 = vsub.f32 %v389, %v484
      %v487 = vand.u32 2147483647, %v486
      %v488 = vsub.f32 %v482, %v487
      %v489 = vand.u32 2147483647, %v488
      %s490 = sadd.s32 %s20, 1
      %s491 = smul.u32 %s490, 16
      %p492 = scmp.lt.s32.totalorder %s491, 16
      %s493 = scalar_select %p492, 1.0416667e-05, 0.0
      %v494 = vld [vmem:[%s385] sm:$0x1]
      %v495 = vstv %s493
      %v496 = vmul.f32 %v489, %v495
      %v498 = vrot.slane %v496, 7
      %v500 = vadd.f32 %v494, %v498
      %501 = vst [vmem:[%s385] sm:$0x1] %v500
      %p502 = scmp.lt.s32.totalorder %s19, 3
      %s503 = scalar_select %p502, %s19, 3
      %p504 = scmp.lt.s32.totalorder %s20, 0
      %s505 = scalar_select %p504, %s20, 0
      %s506 = sadd.s32 %s505, %s503
      %s507 = smul.addr %s506, 8
      %s508 = scalar_lea.vmem %s4, %s507
      // Predicated region
      $region37: #{multi_scale_loss.1} parent=35 // pred_check
        %p509 = pneg %p175
      $region38: #{multi_scale_loss.1} parent=35 // pred_check_branch
        %511 = sbr.rel (%p509) target = $region40
      $region39: #{multi_scale_loss.1} parent=35 // pred_region
        _
      $region40: #{multi_scale_loss.1} parent=35 // pred_fallthru
        _
    $region36: #{multi_scale_loss.1} parent=5 // pred_fallthru
      _
    %p512 = scmp.le.s32.totalorder 2, %s10
    // Predicated region
    $region41: #{multi_scale_loss.1} parent=5 // pred_check
      %p513 = pneg %p512
    $region42: #{multi_scale_loss.1} parent=5 // pred_check_branch
      %515 = sbr.rel (%p513) target = $region44
    $region43: #{multi_scale_loss.1} parent=5 // pred_region
      %s516 = ssub.s32 %s10, 2
      // Predicated region
      $region45: #{multi_scale_loss.1} parent=43 // pred_check
        %p517 = pneg %p181
      $region46: #{multi_scale_loss.1} parent=43 // pred_check_branch
        %519 = sbr.rel (%p517) target = $region48
      $region47: #{multi_scale_loss.1} parent=43 // pred_region
        %p520 = scmp.lt.s32.totalorder %s21, 3
        %s521 = scalar_select %p520, %s21, 3
        %p522 = scmp.lt.s32.totalorder %s22, 0
        %s523 = scalar_select %p522, %s22, 0
        %s524 = sadd.s32 %s523, %s521
        %s525 = smul.addr %s524, 8
        %s526 = scalar_lea.vmem %s4, %s525
      $region48: #{multi_scale_loss.1} parent=43 // pred_fallthru
        _
    $region44: #{multi_scale_loss.1} parent=5 // pred_fallthru
      _
  $region6: #{multi_scale_loss.1} parent=0 // loop_footer
    %s14 = sadd.s32 1, %s10
  $region7: #{multi_scale_loss.1} parent=0 // loop_footer_branch
    %9 = sbr.rel target = $region3
  $region8: #{multi_scale_loss.1} parent=0 // loop_exit
    _

</llo_original>
